<compile_context>
chip_gen: v7x
topology: tpu7x:2x2x1
jax: 0.10.0
libtpu: 0.0.40
codegen_flags: <defaults>
</compile_context>

<pallas_src>
import functools

import jax
import jax.numpy as jnp
from jax.experimental import pallas as pl
from jax.experimental.pallas import tpu as pltpu

_LANE = 128
_SUBLANE = 8
_MAX_TB = 2048          # batch-tile rows; ~2.5 MiB/tile double-buffered at K=32
_XLA_FAST_PATH_B = 64   # below this, custom-call launch overhead dominates


def _round_up(x, m):
    return ((x + m - 1) // m) * m


def _mean_kernel(x_ref, wt_ref, b_ref, mean_ref):
    # x_ref:    [TB, K]       (one batch tile; may be bf16 or f32)
    # wt_ref:   [K,  N_pad]   (pre-transposed, lane-padded Linear weight)
    # b_ref:    [1,  N_pad]   (lane-padded Linear bias, always f32)
    # mean_ref: [TB, N_pad]   (lane-dense output tile -> unmasked vst)
    acc = jnp.dot(x_ref[...], wt_ref[...], preferred_element_type=jnp.float32)
    mean_ref[...] = (acc + b_ref[...]).astype(mean_ref.dtype)  # bias add in f32


def prepare_params(weight, bias, stream_dtype=jnp.float32):
    """One-time param prep: transpose PyTorch Linear weight and pad lanes to 128.

    Args:
      weight: [num_outputs, num_inputs] (PyTorch nn.Linear layout)
      bias:   [num_outputs]
      stream_dtype: dtype of the streamed weight (f32 or bf16)
    Returns:
      wt_pad: [num_inputs, N_pad] stream_dtype
      b_pad:  [1, N_pad]          float32 (bias add stays in f32)
    """
    num_outputs, num_inputs = weight.shape
    n_pad = _round_up(num_outputs, _LANE)
    wt = jnp.asarray(weight, jnp.float32).T  # [K, N]
    wt_pad = (
        jnp.zeros((num_inputs, n_pad), jnp.float32)
        .at[:, :num_outputs]
        .set(wt)
        .astype(stream_dtype)
    )
    b_pad = jnp.zeros((1, n_pad), jnp.float32).at[0, :num_outputs].set(
        jnp.asarray(bias, jnp.float32)
    )
    return wt_pad, b_pad


def _pick_batch_tile(B):
    """Pick a batch tile giving >= 2 roughly equal grid steps when possible
    (keeps both v7x TensorCores fed) without exceeding _MAX_TB."""
    nsteps = 2 * ((B + 2 * _MAX_TB - 1) // (2 * _MAX_TB))  # 2*ceil(B/(2*MAX_TB))
    tb = min(_MAX_TB, _round_up((B + nsteps - 1) // nsteps, _SUBLANE))
    return tb


@functools.partial(jax.jit, static_argnames=("out_dtype", "force_pallas"))
def diag_gaussian_mean_padded(x, wt_pad, b_pad, *, out_dtype=jnp.float32,
                              force_pallas=False):
    """Compute the lane-padded action mean slab [B, N_pad] = x @ W.T + b (padded).

    Downstream consumers that can handle the padded lane dim should use this
    directly and avoid the lane-slice copy in diag_gaussian_forward.
    """
    B, K = x.shape
    n_pad = wt_pad.shape[1]

    # Small-batch fast path: Pallas launch + DMA setup dominates -> plain XLA dot.
    if B <= _XLA_FAST_PATH_B and not force_pallas:
        acc = jnp.dot(x, wt_pad, preferred_element_type=jnp.float32)
        return (acc + b_pad).astype(out_dtype)

    tb = _pick_batch_tile(B)
    grid = (pl.cdiv(B, tb),)  # ragged trailing block handled by Pallas masking

    return pl.pallas_call(
        _mean_kernel,
        out_shape=jax.ShapeDtypeStruct((B, n_pad), out_dtype),
        grid=grid,
        in_specs=[
            pl.BlockSpec((tb, K), lambda i: (i, 0)),
            pl.BlockSpec((K, n_pad), lambda i: (0, 0)),
            pl.BlockSpec((1, n_pad), lambda i: (0, 0)),
        ],
        out_specs=pl.BlockSpec((tb, n_pad), lambda i: (i, 0)),
        compiler_params=pltpu.CompilerParams(
            dimension_semantics=("parallel",),
        ),
    )(x, wt_pad, b_pad)


@functools.partial(
    jax.jit, static_argnames=("num_outputs", "out_dtype", "force_pallas")
)
def diag_gaussian_forward(x, wt_pad, b_pad, logstd_bias, *, num_outputs,
                          out_dtype=jnp.float32, force_pallas=False):
    """Pallas implementation of DiagGaussian.forward.

    Args:
      x:           [B, num_inputs] (f32 or bf16)
      wt_pad:      [num_inputs, N_pad] (from prepare_params)
      b_pad:       [1, N_pad] f32      (from prepare_params)
      logstd_bias: [num_outputs]       (the AddBias parameter)
      num_outputs: static int

    Returns:
      (action_mean [B, num_outputs], action_logstd [B, num_outputs])
    """
    B = x.shape[0]
    mean_padded = diag_gaussian_mean_padded(
        x, wt_pad, b_pad, out_dtype=out_dtype, force_pallas=force_pallas
    )
    # NOTE: this lane-slice is an extra HBM pass for very large B; consumers that
    # can work on the padded slab should call diag_gaussian_mean_padded directly.
    action_mean = mean_padded[:, :num_outputs]
    # action_logstd = zeros + logstd bias: data-independent broadcast, done in XLA.
    action_logstd = jnp.broadcast_to(
        jnp.asarray(logstd_bias, jnp.float32)[None, :], (B, num_outputs)
    )
    return action_mean, action_logstd


if __name__ == "__main__":
    # Small shapes consistent with the module: x is [batch, num_inputs].
    B, num_inputs, num_outputs = 8, 32, 8

    key = jax.random.PRNGKey(0)
    kx, kw, kb = jax.random.split(key, 3)

    x = jax.random.normal(kx, (B, num_inputs), dtype=jnp.float32)

    # Deterministic parameter init mimicking nn.Linear's uniform(-1/sqrt(fan_in), ...).
    bound = 1.0 / jnp.sqrt(jnp.float32(num_inputs))
    weight = jax.random.uniform(
        kw, (num_outputs, num_inputs), dtype=jnp.float32, minval=-bound, maxval=bound
    )
    bias = jax.random.uniform(
        kb, (num_outputs,), dtype=jnp.float32, minval=-bound, maxval=bound
    )
    # AddBias parameter: torch.zeros(num_outputs)
    logstd_bias = jnp.zeros((num_outputs,), dtype=jnp.float32)

    # --- f32 path, small batch, Pallas forced on so the kernel itself runs ---
    wt_pad, b_pad = prepare_params(weight, bias)
    action_mean, action_logstd = diag_gaussian_forward(
        x, wt_pad, b_pad, logstd_bias, num_outputs=num_outputs, force_pallas=True
    )
    jax.block_until_ready((action_mean, action_logstd))

    ref_mean = x @ weight.T + bias
    ref_logstd = jnp.zeros((B, num_outputs), jnp.float32) + logstd_bias
    assert action_mean.shape == (B, num_outputs)
    assert action_logstd.shape == (B, num_outputs)
    assert jnp.allclose(action_mean, ref_mean, atol=1e-5, rtol=1e-5)
    assert jnp.allclose(action_logstd, ref_logstd, atol=1e-6)

    # --- f32 path, large non-tile-aligned batch: ragged grid (no x pre-pad) ---
    B2 = 1000
    x2 = jax.random.normal(jax.random.PRNGKey(1), (B2, num_inputs), dtype=jnp.float32)
    m2, s2 = diag_gaussian_forward(
        x2, wt_pad, b_pad, logstd_bias, num_outputs=num_outputs
    )
    jax.block_until_ready((m2, s2))
    assert jnp.allclose(m2, x2 @ weight.T + bias, atol=1e-4, rtol=1e-5)
    assert jnp.allclose(s2, jnp.zeros((B2, num_outputs)) + logstd_bias, atol=1e-6)

    # --- bf16 streaming path (halves dominant HBM traffic); f32 MXU accumulate ---
    wt_pad_bf, b_pad_bf = prepare_params(weight, bias, stream_dtype=jnp.bfloat16)
    m3, s3 = diag_gaussian_forward(
        x2.astype(jnp.bfloat16), wt_pad_bf, b_pad_bf, logstd_bias,
        num_outputs=num_outputs, out_dtype=jnp.bfloat16,
    )
    jax.block_until_ready((m3, s3))
    assert jnp.allclose(
        m3.astype(jnp.float32), x2 @ weight.T + bias, atol=3e-2, rtol=3e-2
    )
    assert jnp.allclose(s3, jnp.zeros((B2, num_outputs)) + logstd_bias, atol=1e-6)

    print("KERNEL_OK")
</pallas_src>

<mosaic_0001>
module attributes {stable_mosaic.version = 11 : i64} {
  func.func @_mean_kernel(%arg0: i32, %arg1: memref<8x32xf32, #tpu.memory_space<vmem>>, %arg2: memref<32x128xf32, #tpu.memory_space<vmem>>, %arg3: memref<1x128xf32, #tpu.memory_space<vmem>>, %arg4: memref<8x128xf32, #tpu.memory_space<vmem>>) attributes {dimension_semantics = [#tpu.dimension_semantics<parallel>], iteration_bounds = array<i64: 1>, scalar_prefetch = 0 : i64, scratch_operands = 0 : i64, tpu.core_type = #tpu.core_type<tc>, window_params = [{transform_indices = @transform_0, window_bounds = array<i64: 8, 32>}, {pipeline_mode = #tpu.pipeline_mode<synchronous>, transform_indices = @transform_1, window_bounds = array<i64: 32, 128>}, {pipeline_mode = #tpu.pipeline_mode<synchronous>, transform_indices = @transform_2, window_bounds = array<i64: 1, 128>}, {transform_indices = @transform_3, window_bounds = array<i64: 8, 128>}]} {
    %c0 = arith.constant 0 : index
    %c0_0 = arith.constant 0 : index
    %0 = vector.load %arg1[%c0, %c0_0] : memref<8x32xf32, #tpu.memory_space<vmem>>, vector<8x32xf32>
    %c0_1 = arith.constant 0 : index
    %c0_2 = arith.constant 0 : index
    %1 = vector.load %arg2[%c0_1, %c0_2] : memref<32x128xf32, #tpu.memory_space<vmem>>, vector<32x128xf32>
    %cst = arith.constant dense<0.000000e+00> : vector<8x128xf32>
    %2 = tpu.matmul %0, %1, %cst {dimension_numbers = #tpu.dot_dimension_numbers<[1], [0], [0], [1], [0, 0, 1, 1], [], []>} : vector<8x32xf32>, vector<32x128xf32>, vector<8x128xf32> -> vector<8x128xf32>
    %c0_3 = arith.constant 0 : index
    %c0_4 = arith.constant 0 : index
    %3 = vector.load %arg3[%c0_3, %c0_4] : memref<1x128xf32, #tpu.memory_space<vmem>>, vector<1x128xf32>
    %4 = vector.broadcast %3 : vector<1x128xf32> to vector<8x128xf32>
    %5 = arith.addf %2, %4 : vector<8x128xf32>
    %c0_5 = arith.constant 0 : index
    %c0_6 = arith.constant 0 : index
    %6 = vector.load %arg4[%c0_5, %c0_6] : memref<8x128xf32, #tpu.memory_space<vmem>>, vector<8x128xf32>
    tpu.vector_store %arg4[%c0_5, %c0_6], %5 {strides = array<i32>} : memref<8x128xf32, #tpu.memory_space<vmem>>, vector<8x128xf32>,
    return
  }
  func.func @transform_0(%arg0: i32) -> (i32, i32) {
    %c0_i32 = arith.constant 0 : i32
    %c0_i32_0 = arith.constant 0 : i32
    return %arg0, %c0_i32 : i32, i32
  }
  func.func @transform_1(%arg0: i32) -> (i32, i32) {
    %c0_i32 = arith.constant 0 : i32
    %c0_i32_0 = arith.constant 0 : i32
    %c0_i32_1 = arith.constant 0 : i32
    return %c0_i32, %c0_i32_0 : i32, i32
  }
  func.func @transform_2(%arg0: i32) -> (i32, i32) {
    %c0_i32 = arith.constant 0 : i32
    %c0_i32_0 = arith.constant 0 : i32
    %c0_i32_1 = arith.constant 0 : i32
    return %c0_i32, %c0_i32_0 : i32, i32
  }
  func.func @transform_3(%arg0: i32) -> (i32, i32) {
    %c0_i32 = arith.constant 0 : i32
    %c0_i32_0 = arith.constant 0 : i32
    return %arg0, %c0_i32 : i32, i32
  }
}

</mosaic_0001>

<llo_original>
// kernel: diag_gaussian_mean_padded.1
$region0: #{diag_gaussian_mean_padded.1}
  #allocation0 [shape = 'u32[]', space=smem, size = 0x4, offset = 0x4, fixed_abs, tag = 'smem constant byte address 0x4 - core index']
  #allocation1 [shape = 'u32[144,128]{1,0:T(1,128)}', space=vmem, size = 0x12000, scoped, tag = 'internal scratch']
  %s0 = inlined_call_operand.hbm [shape: f32[8,32], index: 0, kind: input, shape index: {}]
  %s1 = inlined_call_operand.hbm [shape: f32[32,128], index: 1, kind: input, shape index: {}]
  %s2 = inlined_call_operand.vmem [shape: f32[1,128], index: 2, kind: input, shape index: {}]
  %s3 = inlined_call_operand.hbm [shape: f32[8,128], index: 3, kind: output, shape index: {}]
  %s4 = sld [smem:[#allocation0]]
  $region30: #{diag_gaussian_mean_padded.1} parent=0
    _
  %s6 = ssub.s32 1, %s4
  %s7 = scalar_select 0, %s6, %s4
  $region1: #{diag_gaussian_mean_padded.1} parent=0
    #allocation2 [shape = 'u8[4096]{0}', space=vmem, size = 0x1000, scoped, tag = 'input window, operand 0, single buffered']
    #allocation3 [shape = 's32[1]{0}', space=sflag, size = 0x4, scoped, tag = 'scoped memory for diag_gaussian_mean_padded.1']
    #allocation4 [shape = 's32[1]{0}', space=sflag, size = 0x4, scoped, tag = 'scoped memory for diag_gaussian_mean_padded.1']
    #allocation5 [shape = 'u8[16384]{0}', space=vmem, size = 0x4000, scoped, tag = 'input window, operand 1, single buffered']
    #allocation6 [shape = 's32[1]{0}', space=sflag, size = 0x4, scoped, tag = 'scoped memory for diag_gaussian_mean_padded.1']
    #allocation7 [shape = 'u8[4096]{0}', space=vmem, size = 0x1000, scoped, tag = 'output window, operand 0, single buffered']
    %8 = vsyncpa [#allocation3], 0
    %9 = vsyncpa [#allocation6], 0
    %10 = vsyncpa [#allocation4], 0
    // Predicated region
    $region2: #{diag_gaussian_mean_padded.1} parent=1 // pred_check
      _
    $region3: #{diag_gaussian_mean_padded.1} parent=1 // pred_check_branch
      %12 = sbr.rel (0) target = $region5
    $region4: #{diag_gaussian_mean_padded.1} parent=1 // pred_region
      %s14 = ssub.s32 128, 128
      %15 = vsyncadd [#allocation3], %s14
      %s17 = sshll.u32 [#allocation2], 4
      %s18 = int_to_ptr.vmem [resolvable:$true] %s17
      %20 = dma.hbm_to_vmem [thread:$0]  %s0, 128, %s18, [#allocation3]
    $region5: #{diag_gaussian_mean_padded.1} parent=1 // pred_fallthru
      _
    // Predicated region
    $region6: #{diag_gaussian_mean_padded.1} parent=1 // pred_check
      _
    $region7: #{diag_gaussian_mean_padded.1} parent=1 // pred_check_branch
      %22 = sbr.rel (0) target = $region9
    $region8: #{diag_gaussian_mean_padded.1} parent=1 // pred_region
      %s24 = ssub.s32 512, 512
      %25 = vsyncadd [#allocation6], %s24
      %s26 = sshll.u32 [#allocation5], 4
      %s27 = int_to_ptr.vmem [resolvable:$true] %s26
      %32 = dma.hbm_to_vmem [thread:$0]  %s1, 512, %s27, [#allocation6], 128, 128, 8
    $region9: #{diag_gaussian_mean_padded.1} parent=1 // pred_fallthru
      _
    // Predicated region
    $region10: #{diag_gaussian_mean_padded.1} parent=1 // pred_check
      _
    $region11: #{diag_gaussian_mean_padded.1} parent=1 // pred_check_branch
      %34 = sbr.rel (0) target = $region13
    $region12: #{diag_gaussian_mean_padded.1} parent=1 // pred_region
      _
    $region13: #{diag_gaussian_mean_padded.1} parent=1 // pred_fallthru
      _
    // Predicated region
    $region14: #{diag_gaussian_mean_padded.1} parent=1 // pred_check
      _
    $region15: #{diag_gaussian_mean_padded.1} parent=1 // pred_check_branch
      %36 = sbr.rel (0) target = $region17
    $region16: #{diag_gaussian_mean_padded.1} parent=1 // pred_region
      %37 = dma.done [#allocation3], 128
    $region17: #{diag_gaussian_mean_padded.1} parent=1 // pred_fallthru
      _
    // Predicated region
    $region18: #{diag_gaussian_mean_padded.1} parent=1 // pred_check
      _
    $region19: #{diag_gaussian_mean_padded.1} parent=1 // pred_check_branch
      %39 = sbr.rel (0) target = $region21
    $region20: #{diag_gaussian_mean_padded.1} parent=1 // pred_region
      %40 = dma.done [#allocation6], 512
    $region21: #{diag_gaussian_mean_padded.1} parent=1 // pred_fallthru
      _
    %v41 = vld [vmem:[#allocation2] sm:$0xff]
    %v42 = vld [vmem:[#allocation5] sm:$0xff]
    %v43 = vld [vmem:[#allocation5 + $0x8] sm:$0xff]
    %v44 = vld [vmem:[#allocation5 + $0x10] sm:$0xff]
    %v45 = vld [vmem:[#allocation5 + $0x18] sm:$0xff]
    %v46 = vld [vmem:[%s2] sm:$0x1]
    %v48 = vlaneseq
    %v49 = vshrl.u32 %v48, 7
    %v50 = vsub.s32 0, %v49
    %v51 = vrot.slane %v46, %v50
    %vm53 = vcmask 261120
    %v55 = vsel %vm53, %v41, 0
    %57 = vmatprep.subr.mxu0 0.0
    %58 = vmatpush1.msra.mxu0 %v42
    %59 = vmatprep.subr.mxu0 0.0
    %60 = vmatpush1.msra.mxu0 %v43
    %61 = vmatprep.subr.mxu0 0.0
    %62 = vmatpush1.msra.mxu0 %v44
    %63 = vmatprep.subr.mxu0 0.0
    %64 = vmatpush1.msra.mxu0 %v45
    %65 = vmatprep.subr.mxu0 0.0
    %66 = vmatpush1.msra.mxu0 0.0
    %67 = vmatprep.subr.mxu0 0.0
    %68 = vmatpush1.msra.mxu0 0.0
    %69 = vmatprep.subr.mxu0 0.0
    %70 = vmatpush1.msra.mxu0 0.0
    %71 = vmatprep.subr.mxu0 0.0
    %72 = vmatpush1.msra.mxu0 0.0
    %73 = vmatprep.subr.mxu0 0.0
    %74 = vmatpush1.msra.mxu0 0.0
    %75 = vmatprep.subr.mxu0 0.0
    %76 = vmatpush1.msra.mxu0 0.0
    %77 = vmatprep.subr.mxu0 0.0
    %78 = vmatpush1.msra.mxu0 0.0
    %79 = vmatprep.subr.mxu0 0.0
    %80 = vmatpush1.msra.mxu0 0.0
    %81 = vmatprep.subr.mxu0 0.0
    %82 = vmatpush1.msra.mxu0 0.0
    %83 = vmatprep.subr.mxu0 0.0
    %84 = vmatpush1.msra.mxu0 0.0
    %85 = vmatprep.subr.mxu0 0.0
    %86 = vmatpush1.msra.mxu0 0.0
    %87 = vmatprep.subr.mxu0 0.0
    %88 = vmatpush1.msra.mxu0 0.0
    %89 = vmatprep.subr.mxu0 0.0
    %90 = vmatpush1.msra.mxu0 0.0
    %91 = vmatprep.subr.mxu0 0.0
    %92 = vmatpush1.msra.mxu0 0.0
    %93 = vmatprep.subr.mxu0 0.0
    %94 = vmatpush1.msra.mxu0 0.0
    %95 = vmatprep.subr.mxu0 0.0
    %96 = vmatpush1.msra.mxu0 0.0
    %97 = vmatprep.subr.mxu0 0.0
    %98 = vmatpush1.msra.mxu0 0.0
    %99 = vmatprep.subr.mxu0 0.0
    %100 = vmatpush1.msra.mxu0 0.0
    %101 = vmatprep.subr.mxu0 0.0
    %102 = vmatpush1.msra.mxu0 0.0
    %103 = vmatprep.subr.mxu0 0.0
    %104 = vmatpush1.msra.mxu0 0.0
    %105 = vmatprep.subr.mxu0 0.0
    %106 = vmatpush1.msra.mxu0 0.0
    %107 = vmatprep.subr.mxu0 0.0
    %108 = vmatpush1.msra.mxu0 0.0
    %109 = vmatprep.subr.mxu0 0.0
    %110 = vmatpush1.msra.mxu0 0.0
    %111 = vmatprep.subr.mxu0 0.0
    %112 = vmatpush1.msra.mxu0 0.0
    %113 = vmatprep.subr.mxu0 0.0
    %114 = vmatpush1.msra.mxu0 0.0
    %115 = vmatprep.subr.mxu0 0.0
    %116 = vmatpush1.msra.mxu0 0.0
    %117 = vmatprep.subr.mxu0 0.0
    %118 = vmatpush1.msra.mxu0 0.0
    %119 = vmatprep.subr.mxu0 0.0
    %120 = vmatpush1.msra.mxu0 0.0
    %121 = vmatprep.mubr.f32.mxu0 0.0
    %122 = vmatmul.mubr.f32.gmra.mrb[0].mxu0 %v55
    %v123 = vpop.f32.mrb[0].mxu0
    %v124 = vadd.f32 %v51, %v123
    %v125 = vpop.f32.mrb[0].mxu0
    %126 = vdwg.mxu0
    %127 = vst [vmem:[#allocation7] sm:$0xff] %v124
    // Predicated region
    $region22: #{diag_gaussian_mean_padded.1} parent=1 // pred_check
      _
    $region23: #{diag_gaussian_mean_padded.1} parent=1 // pred_check_branch
      %129 = sbr.rel (0) target = $region25
    $region24: #{diag_gaussian_mean_padded.1} parent=1 // pred_region
      %s131 = ssub.s32 128, 128
      %132 = vsyncadd [#allocation4], %s131
      %s134 = sshll.u32 [#allocation7], 4
      %s135 = int_to_ptr.vmem [resolvable:$true] %s134
      %137 = dma.vmem_to_hbm [thread:$0]  %s135, 128, %s3, [#allocation4]
    $region25: #{diag_gaussian_mean_padded.1} parent=1 // pred_fallthru
      _
    // Predicated region
    $region26: #{diag_gaussian_mean_padded.1} parent=1 // pred_check
      _
    $region27: #{diag_gaussian_mean_padded.1} parent=1 // pred_check_branch
      %139 = sbr.rel (0) target = $region29
    $region28: #{diag_gaussian_mean_padded.1} parent=1 // pred_region
      %140 = dma.done [#allocation4], 128
    $region29: #{diag_gaussian_mean_padded.1} parent=1 // pred_fallthru
      _
    %141 = vsyncpa [#allocation3], 1
    %142 = vsyncpa [#allocation6], 1
    %143 = vsyncpa [#allocation4], 1

</llo_original>
